<compile_context>
chip_gen: v5e
topology: v5e:2x2
jax: 0.10.0
libtpu: 0.0.40
codegen_flags: <defaults>
</compile_context>

<pallas_src>
import functools

import jax
import jax.numpy as jnp
from jax import lax
from jax.experimental import pallas as pl
from jax.experimental.pallas import tpu as pltpu


def _cdiv(a, b):
    return -(-a // b)


def _round_up(x, m):
    return _cdiv(x, m) * m


def _num_tensorcores():
    """Best-effort TensorCore count per chip (v7x: 2); defaults to 1."""
    try:
        info = pltpu.get_tpu_info()
        for name in ("num_cores", "core_count", "num_tensorcores", "tensorcore_count"):
            v = getattr(info, name, None)
            if v is not None and int(v) > 0:
                return int(v)
    except Exception:
        pass
    return 1


def _kernel_loss_kernel(w_ref, a_ref, out_ref, acc_ref, *,
                        H, KH, KW, LW, G, NSTEPS, scale):
    """One grid step = G lane-packed sub-blocks of the batch.

    w_ref  : (G, KH*KW, LWP) f32  per-lane delta-kernel taps, pre-shifted by dx
    a_ref  : (G, Hp, LWP)         lane-packed, 'same'-padded activations
    out_ref: (1, 1, 1) f32        per-core partial loss (written at last step)
    acc_ref: (H, LW) f32          running Huber accumulator (VMEM scratch)
    """
    n = pl.program_id(1)

    @pl.when(n == 0)
    def _():
        acc_ref[...] = jnp.zeros_like(acc_ref)

    def sub_block(g, carry):
        w_all = w_ref[g]                                      # (KH*KW, LWP)
        parts = [None] * KW                                   # KW partial sums
        for dy in range(KH):
            # Load/upcast one dy band straight from the ref: keeps live state
            # to ~(KW+2) (H, LWP) arrays, no full-tile materialization.
            rows = a_ref[g, dy:dy + H, :].astype(jnp.float32)  # (H, LWP)
            for dx in range(KW):
                t = dy * KW + dx
                term = rows * w_all[t:t + 1, :]               # elementwise, no shift
                parts[dx] = term if parts[dx] is None else parts[dx] + term
        # Only KW lane shifts per sub-block (weights were pre-shifted by dx).
        d = parts[0][:, 0:LW]
        for dx in range(1, KW):
            d = d + parts[dx][:, dx:dx + LW]
        # Huber loss (delta = 1).  Dead lanes (per-sample halo columns, batch
        # padding, lane round-up) have zero weight -> d == 0 -> contribute 0.
        ad = jnp.abs(d)
        hub = jnp.where(ad < 1.0, 0.5 * d * d, ad - 0.5)
        acc_ref[...] += hub
        return carry

    if G == 1:
        sub_block(0, 0)
    else:
        lax.fori_loop(0, G, sub_block, 0)

    # Finalize: one cross-lane reduction + scaling per core.
    @pl.when(n == NSTEPS - 1)
    def _():
        out_ref[...] = (jnp.sum(acc_ref[...], keepdims=True) * scale).reshape(1, 1, 1)


def kernel_loss(kernel_pred, activation, kernel, target=None):
    """kernel_pred, kernel: [B, 1, KH, KW]; activation: [B, H, W].

    `target` is accepted but unused -- the reference PyTorch module never
    reads it.
    """
    del target
    B, _, KH, KW = kernel_pred.shape
    _, H, W = activation.shape

    # 'same' zero padding (matches PyTorch for odd kernel sizes; tests use 3x3).
    pad_t = (KH - 1) // 2
    pad_b = KH - 1 - pad_t
    pad_l = (KW - 1) // 2
    pad_r = KW - 1 - pad_l
    Hp = H + KH - 1
    Wp = W + KW - 1

    # ---- Tiling choices ------------------------------------------------------
    # Lane budget per sub-block from vreg pressure: ~(KW+2) live (H, LWP) f32
    # arrays must fit comfortably inside the 64 x 4KiB vreg file.
    budget = (48 * 1024) // ((KW + 2) * max(H, 1))
    budget = max(128, min(2048, (budget // 128) * 128))
    TB = max(1, min(B, (budget - (KW - 1)) // Wp))   # samples packed per sub-block
    LW = _round_up(TB * Wp, 128)                     # output / accumulator lanes
    LWP = _round_up(LW + (KW - 1), 128)              # activation / weight lanes (halo)

    act_bytes = jnp.dtype(activation.dtype).itemsize
    NSB = _cdiv(B, TB)                               # total sub-blocks
    # Sub-blocks per grid step: amortize the ~600-cycle per-step overhead while
    # keeping the double-buffered per-step DMA well inside VMEM.
    per_sb_bytes = Hp * LWP * act_bytes + KH * KW * LWP * 4
    g_compute = _cdiv(512 * 1024, H * LW)
    g_vmem = max(1, (10 * 1024 * 1024) // (2 * per_sb_bytes))
    G = max(1, min(NSB, g_compute, g_vmem))

    nsteps_total = _cdiv(NSB, G)
    NC = max(1, min(_num_tensorcores(), nsteps_total))   # v7x: use both cores
    NSTEPS = _cdiv(nsteps_total, NC)
    NBLK = NC * NSTEPS * G                           # sub-blocks incl. padding
    Bp = NBLK * TB                                   # zero-padded batch (exact: huber(0)=0)

    # ---- Delta-kernel per-lane weights, pre-shifted by dx --------------------
    kd = (kernel_pred.astype(jnp.float32)
          - kernel.astype(jnp.float32)).reshape(B, KH * KW)
    kd = jnp.pad(kd, ((0, Bp - B), (0, 0))).reshape(NBLK, TB, KH * KW)

    lane = jnp.arange(LW)
    samp = jnp.minimum(lane // Wp, TB - 1)
    valid = ((lane < TB * Wp) & ((lane % Wp) < W)).astype(jnp.float32)
    # (NBLK, KH*KW, LW): each sample's tap broadcast across its Wp lanes; zero
    # on per-sample halo columns, batch padding and lane round-up.
    kd_lanes = jnp.take(kd, samp, axis=1).transpose(0, 2, 1) * valid[None, None, :]
    # Pre-shift tap (dy, dx) right by dx into the LWP-wide slab so the kernel's
    # multiplies are un-shifted and only the KW partial sums need a lane shift.
    w_rows = []
    for dy in range(KH):
        for dx in range(KW):
            t = dy * KW + dx
            w_rows.append(jnp.pad(kd_lanes[:, t, :], ((0, 0), (dx, LWP - LW - dx))))
    w_slab = jnp.stack(w_rows, axis=1)               # (NBLK, KH*KW, LWP) f32

    # ---- Lane-packed, 'same'-padded activation slab (original dtype) ---------
    # TODO(synk): this relayout costs one extra HBM round trip of the activation;
    # fuse it into the pallas_call operand (allow_input_fusion) or cache the
    # packed slab when the loss is evaluated repeatedly on the same activation.
    a_pad = jnp.pad(activation, ((0, Bp - B), (pad_t, pad_b), (pad_l, pad_r)))
    a_slab = (a_pad.reshape(NBLK, TB, Hp, Wp)
              .transpose(0, 2, 1, 3)
              .reshape(NBLK, Hp, TB * Wp))
    a_slab = jnp.pad(a_slab, ((0, 0), (0, 0), (0, LWP - TB * Wp)))

    # loss = mean(huber over B*H*W) / 2 / B = sum(huber) / (2 * B^2 * H * W)
    scale = 1.0 / (2.0 * float(B) * float(B) * float(H) * float(W))

    body = functools.partial(_kernel_loss_kernel, H=H, KH=KH, KW=KW, LW=LW,
                             G=G, NSTEPS=NSTEPS, scale=scale)

    partials = pl.pallas_call(
        body,
        out_shape=jax.ShapeDtypeStruct((NC, 1, 1), jnp.float32),
        grid_spec=pltpu.PrefetchScalarGridSpec(
            num_scalar_prefetch=0,
            grid=(NC, NSTEPS),
            in_specs=[
                pl.BlockSpec((G, KH * KW, LWP), lambda c, n: (c * NSTEPS + n, 0, 0)),
                pl.BlockSpec((G, Hp, LWP), lambda c, n: (c * NSTEPS + n, 0, 0)),
            ],
            out_specs=pl.BlockSpec((1, 1, 1), lambda c, n: (c, 0, 0)),
            scratch_shapes=[pltpu.VMEM((H, LW), jnp.float32)],
        ),
        compiler_params=pltpu.CompilerParams(
            dimension_semantics=("parallel", "arbitrary"),
            vmem_limit_bytes=32 * 1024 * 1024,
        ),
    )(w_slab, a_slab)
    return jnp.sum(partials)


def _reference_loss(kernel_pred, activation, kernel):
    """Plain-JAX replica of the PyTorch forward, for verification."""
    B = kernel_pred.shape[0]
    dn = ("NCHW", "OIHW", "NCHW")
    preds, tgts = [], []
    for i in range(B):
        a = activation[i][None, None].astype(jnp.float32)        # [1,1,H,W]
        wp = kernel_pred[i][None].astype(jnp.float32)            # [1,1,KH,KW]
        wt = kernel[i][None].astype(jnp.float32)
        preds.append(lax.conv_general_dilated(a, wp, (1, 1), "SAME",
                                              dimension_numbers=dn))
        tgts.append(lax.conv_general_dilated(a, wt, (1, 1), "SAME",
                                             dimension_numbers=dn))
    p = jnp.stack(preds, 0)[:, 0]
    t = jnp.stack(tgts, 0)[:, 0]
    d = p - t
    ad = jnp.abs(d)
    hub = jnp.where(ad < 1.0, 0.5 * d * d, ad - 0.5)
    return jnp.mean(hub) / 2.0 / B


if __name__ == "__main__":
    def run_case(B, H, W, KH, KW, key):
        k1, k2, k3, k4 = jax.random.split(key, 4)
        kernel_pred = jax.random.normal(k1, (B, 1, KH, KW), dtype=jnp.float32)
        kernel = jax.random.normal(k2, (B, 1, KH, KW), dtype=jnp.float32)
        activation = jax.random.normal(k3, (B, H, W), dtype=jnp.float32)
        target = jax.random.normal(k4, (B, 1, H, W), dtype=jnp.float32)  # unused
        loss = jax.block_until_ready(kernel_loss(kernel_pred, activation, kernel, target))
        ref = jax.block_until_ready(_reference_loss(kernel_pred, activation, kernel))
        assert jnp.allclose(loss, ref, rtol=1e-4, atol=1e-6), (B, H, W, loss, ref)

    key = jax.random.PRNGKey(0)
    # Primary small case (module-consistent shapes).
    key, sub = jax.random.split(key)
    run_case(B=2, H=16, W=16, KH=3, KW=3, key=sub)
    # Larger batch exercises multi-sub-block packing + the in-kernel fori loop.
    key, sub = jax.random.split(key)
    run_case(B=33, H=16, W=16, KH=3, KW=3, key=sub)

    print("KERNEL_OK")
</pallas_src>

<mosaic_0001>
module attributes {stable_mosaic.version = 11 : i64} {
  func.func @_kernel_loss_kernel(%arg0: i32, %arg1: i32, %arg2: memref<1x9x256xf32, #tpu.memory_space<vmem>>, %arg3: memref<1x18x256xf32, #tpu.memory_space<vmem>>, %arg4: memref<1x1x1xf32, #tpu.memory_space<vmem>>, %arg5: memref<16x128xf32, #tpu.memory_space<vmem>>) attributes {dimension_semantics = [#tpu.dimension_semantics<parallel>, #tpu.dimension_semantics<arbitrary>], iteration_bounds = array<i64: 1, 1>, scalar_prefetch = 0 : i64, scratch_operands = 1 : i64, tpu.core_type = #tpu.core_type<tc>, window_params = [{transform_indices = @transform_0, window_bounds = array<i64: 1, 9, 256>}, {transform_indices = @transform_1, window_bounds = array<i64: 1, 18, 256>}, {transform_indices = @transform_2, window_bounds = array<i64: 1, 1, 1>}]} {
    %c0_i32 = arith.constant 0 : i32
    %0 = arith.cmpi eq, %arg1, %c0_i32 : i32
    %1 = arith.extui %0 : i1 to i32
    %c0_i32_0 = arith.constant 0 : i32
    %2 = arith.cmpi ne, %1, %c0_i32_0 : i32
    scf.if %2 {
      %cst_18 = arith.constant 0.000000e+00 : f32
      %64 = vector.broadcast %cst_18 : f32 to vector<16x128xf32>
      %c0_19 = arith.constant 0 : index
      %c0_20 = arith.constant 0 : index
      %65 = vector.load %arg5[%c0_19, %c0_20] : memref<16x128xf32, #tpu.memory_space<vmem>>, vector<16x128xf32>
      tpu.vector_store %arg5[%c0_19, %c0_20], %64 {strides = array<i32>} : memref<16x128xf32, #tpu.memory_space<vmem>>, vector<16x128xf32>,
    } else {
    }
    %c0 = arith.constant 0 : index
    %c0_1 = arith.constant 0 : index
    %c0_2 = arith.constant 0 : index
    %3 = vector.load %arg2[%c0, %c0_1, %c0_2] : memref<1x9x256xf32, #tpu.memory_space<vmem>>, vector<1x9x256xf32>
    %4 = vector.shape_cast %3 : vector<1x9x256xf32> to vector<9x256xf32>
    %c0_3 = arith.constant 0 : index
    %c0_4 = arith.constant 0 : index
    %c0_5 = arith.constant 0 : index
    %5 = vector.load %arg3[%c0_3, %c0_4, %c0_5] : memref<1x18x256xf32, #tpu.memory_space<vmem>>, vector<1x16x256xf32>
    %6 = vector.shape_cast %5 : vector<1x16x256xf32> to vector<16x256xf32>
    %7 = vector.extract_strided_slice %4 {offsets = [0, 0], sizes = [1, 256], strides = [1, 1]} : vector<9x256xf32> to vector<1x256xf32>
    %8 = vector.broadcast %7 : vector<1x256xf32> to vector<16x256xf32>
    %9 = arith.mulf %6, %8 : vector<16x256xf32>
    %10 = vector.extract_strided_slice %4 {offsets = [1, 0], sizes = [1, 256], strides = [1, 1]} : vector<9x256xf32> to vector<1x256xf32>
    %11 = vector.broadcast %10 : vector<1x256xf32> to vector<16x256xf32>
    %12 = arith.mulf %6, %11 : vector<16x256xf32>
    %13 = vector.extract_strided_slice %4 {offsets = [2, 0], sizes = [1, 256], strides = [1, 1]} : vector<9x256xf32> to vector<1x256xf32>
    %14 = vector.broadcast %13 : vector<1x256xf32> to vector<16x256xf32>
    %15 = arith.mulf %6, %14 : vector<16x256xf32>
    %c0_6 = arith.constant 0 : index
    %c1 = arith.constant 1 : index
    %c0_7 = arith.constant 0 : index
    %16 = vector.load %arg3[%c0_6, %c1, %c0_7] : memref<1x18x256xf32, #tpu.memory_space<vmem>>, vector<1x16x256xf32>
    %17 = vector.shape_cast %16 : vector<1x16x256xf32> to vector<16x256xf32>
    %18 = vector.extract_strided_slice %4 {offsets = [3, 0], sizes = [1, 256], strides = [1, 1]} : vector<9x256xf32> to vector<1x256xf32>
    %19 = vector.broadcast %18 : vector<1x256xf32> to vector<16x256xf32>
    %20 = arith.mulf %17, %19 : vector<16x256xf32>
    %21 = arith.addf %9, %20 : vector<16x256xf32>
    %22 = vector.extract_strided_slice %4 {offsets = [4, 0], sizes = [1, 256], strides = [1, 1]} : vector<9x256xf32> to vector<1x256xf32>
    %23 = vector.broadcast %22 : vector<1x256xf32> to vector<16x256xf32>
    %24 = arith.mulf %17, %23 : vector<16x256xf32>
    %25 = arith.addf %12, %24 : vector<16x256xf32>
    %26 = vector.extract_strided_slice %4 {offsets = [5, 0], sizes = [1, 256], strides = [1, 1]} : vector<9x256xf32> to vector<1x256xf32>
    %27 = vector.broadcast %26 : vector<1x256xf32> to vector<16x256xf32>
    %28 = arith.mulf %17, %27 : vector<16x256xf32>
    %29 = arith.addf %15, %28 : vector<16x256xf32>
    %c0_8 = arith.constant 0 : index
    %c2 = arith.constant 2 : index
    %c0_9 = arith.constant 0 : index
    %30 = vector.load %arg3[%c0_8, %c2, %c0_9] : memref<1x18x256xf32, #tpu.memory_space<vmem>>, vector<1x16x256xf32>
    %31 = vector.shape_cast %30 : vector<1x16x256xf32> to vector<16x256xf32>
    %32 = vector.extract_strided_slice %4 {offsets = [6, 0], sizes = [1, 256], strides = [1, 1]} : vector<9x256xf32> to vector<1x256xf32>
    %33 = vector.broadcast %32 : vector<1x256xf32> to vector<16x256xf32>
    %34 = arith.mulf %31, %33 : vector<16x256xf32>
    %35 = arith.addf %21, %34 : vector<16x256xf32>
    %36 = vector.extract_strided_slice %4 {offsets = [7, 0], sizes = [1, 256], strides = [1, 1]} : vector<9x256xf32> to vector<1x256xf32>
    %37 = vector.broadcast %36 : vector<1x256xf32> to vector<16x256xf32>
    %38 = arith.mulf %31, %37 : vector<16x256xf32>
    %39 = arith.addf %25, %38 : vector<16x256xf32>
    %40 = vector.extract_strided_slice %4 {offsets = [8, 0], sizes = [1, 256], strides = [1, 1]} : vector<9x256xf32> to vector<1x256xf32>
    %41 = vector.broadcast %40 : vector<1x256xf32> to vector<16x256xf32>
    %42 = arith.mulf %31, %41 : vector<16x256xf32>
    %43 = arith.addf %29, %42 : vector<16x256xf32>
    %44 = vector.extract_strided_slice %35 {offsets = [0, 0], sizes = [16, 128], strides = [1, 1]} : vector<16x256xf32> to vector<16x128xf32>
    %45 = vector.extract_strided_slice %39 {offsets = [0, 1], sizes = [16, 128], strides = [1, 1]} : vector<16x256xf32> to vector<16x128xf32>
    %46 = arith.addf %44, %45 : vector<16x128xf32>
    %47 = vector.extract_strided_slice %43 {offsets = [0, 2], sizes = [16, 128], strides = [1, 1]} : vector<16x256xf32> to vector<16x128xf32>
    %48 = arith.addf %46, %47 : vector<16x128xf32>
    %49 = math.absf %48 : vector<16x128xf32>
    %cst = arith.constant 1.000000e+00 : f32
    %50 = vector.broadcast %cst : f32 to vector<16x128xf32>
    %51 = arith.cmpf olt, %49, %50 : vector<16x128xf32>
    %cst_10 = arith.constant 5.000000e-01 : f32
    %52 = vector.broadcast %cst_10 : f32 to vector<16x128xf32>
    %53 = arith.mulf %52, %48 : vector<16x128xf32>
    %54 = arith.mulf %53, %48 : vector<16x128xf32>
    %cst_11 = arith.constant 5.000000e-01 : f32
    %55 = vector.broadcast %cst_11 : f32 to vector<16x128xf32>
    %56 = arith.subf %49, %55 : vector<16x128xf32>
    %57 = arith.select %51, %54, %56 : vector<16x128xi1>, vector<16x128xf32>
    %c0_12 = arith.constant 0 : index
    %c0_13 = arith.constant 0 : index
    %58 = vector.load %arg5[%c0_12, %c0_13] : memref<16x128xf32, #tpu.memory_space<vmem>>, vector<16x128xf32>
    %59 = arith.addf %58, %57 : vector<16x128xf32>
    %c0_14 = arith.constant 0 : index
    %c0_15 = arith.constant 0 : index
    %60 = vector.load %arg5[%c0_14, %c0_15] : memref<16x128xf32, #tpu.memory_space<vmem>>, vector<16x128xf32>
    tpu.vector_store %arg5[%c0_14, %c0_15], %59 {strides = array<i32>} : memref<16x128xf32, #tpu.memory_space<vmem>>, vector<16x128xf32>,
    %c0_i32_16 = arith.constant 0 : i32
    %61 = arith.cmpi eq, %arg1, %c0_i32_16 : i32
    %62 = arith.extui %61 : i1 to i32
    %c0_i32_17 = arith.constant 0 : i32
    %63 = arith.cmpi ne, %62, %c0_i32_17 : i32
    scf.if %63 {
      %c0_18 = arith.constant 0 : index
      %c0_19 = arith.constant 0 : index
      %64 = vector.load %arg5[%c0_18, %c0_19] : memref<16x128xf32, #tpu.memory_space<vmem>>, vector<16x128xf32>
      %65 = vector.shape_cast %64 : vector<16x128xf32> to vector<1x16x128xf32>
      %cst_20 = arith.constant dense<0.000000e+00> : vector<1xf32>
      %66 = vector.multi_reduction <add>, %65, %cst_20 [1, 2] : vector<1x16x128xf32> to vector<1xf32>
      %67 = vector.shape_cast %66 : vector<1xf32> to vector<1x1x1xf32>
      %68 = vector.extract %67[0, 0, 0] : f32 from vector<1x1x1xf32>
      %69 = vector.broadcast %68 : f32 to vector<1x1xf32>
      %cst_21 = arith.constant 4.8828125E-4 : f32
      %70 = vector.broadcast %cst_21 : f32 to vector<1x1xf32>
      %71 = arith.mulf %69, %70 : vector<1x1xf32>
      %72 = vector.shape_cast %71 : vector<1x1xf32> to vector<1x1x1xf32>
      %c0_22 = arith.constant 0 : index
      %c0_23 = arith.constant 0 : index
      %c0_24 = arith.constant 0 : index
      %73 = vector.load %arg4[%c0_22, %c0_23, %c0_24] : memref<1x1x1xf32, #tpu.memory_space<vmem>>, vector<1x1x1xf32>
      tpu.vector_store %arg4[%c0_22, %c0_23, %c0_24], %72 {strides = array<i32>} : memref<1x1x1xf32, #tpu.memory_space<vmem>>, vector<1x1x1xf32>,
    } else {
    }
    return
  }
  func.func @transform_0(%arg0: i32, %arg1: i32) -> (i32, i32, i32) {
    %c1_i32 = arith.constant 1 : i32
    %0 = arith.muli %arg0, %c1_i32 : i32
    %1 = arith.addi %0, %arg1 : i32
    %c0_i32 = arith.constant 0 : i32
    %c0_i32_0 = arith.constant 0 : i32
    %c0_i32_1 = arith.constant 0 : i32
    return %1, %c0_i32, %c0_i32_0 : i32, i32, i32
  }
  func.func @transform_1(%arg0: i32, %arg1: i32) -> (i32, i32, i32) {
    %c1_i32 = arith.constant 1 : i32
    %0 = arith.muli %arg0, %c1_i32 : i32
    %1 = arith.addi %0, %arg1 : i32
    %c0_i32 = arith.constant 0 : i32
    %c0_i32_0 = arith.constant 0 : i32
    %c0_i32_1 = arith.constant 0 : i32
    return %1, %c0_i32, %c0_i32_0 : i32, i32, i32
  }
  func.func @transform_2(%arg0: i32, %arg1: i32) -> (i32, i32, i32) {
    %c0_i32 = arith.constant 0 : i32
    %c0_i32_0 = arith.constant 0 : i32
    %c0_i32_1 = arith.constant 0 : i32
    return %arg0, %c0_i32, %c0_i32_0 : i32, i32, i32
  }
}

</mosaic_0001>

<llo_original>
// kernel: tpu_custom_call.1
$region0: #{tpu_custom_call.1}
  #allocation0 [shape = 'u32[]', space=smem, size = 0x4, offset = 0x4, fixed_abs, tag = 'smem constant byte address 0x4 - core index']
  #allocation1 [shape = 'u32[72,128]{1,0:T(1,128)}', space=vmem, size = 0x9000, scoped, tag = 'internal scratch']
  #allocation2 [shape = 'f32[16,128]{1,0:T(8,128)}', space=vmem, size = 0x2000, scoped, tag = 'scratch operand']
  %s0 = inlined_call_operand.vmem [shape: f32[1,9,256], index: 0, kind: input, shape index: {}]
  %s1 = inlined_call_operand.vmem [shape: f32[1,18,256], index: 1, kind: input, shape index: {}]
  %s2 = inlined_call_operand.hbm [shape: f32[1,1,1], index: 2, kind: output, shape index: {}]
  %s3 = sld [smem:[#allocation0]]
  $region26: #{tpu_custom_call.1} parent=0
    _
  %s5 = ssub.s32 1, %s3
  %s6 = scalar_select 0, %s5, %s3
  $region1: #{tpu_custom_call.1} parent=0
    #allocation3 [shape = 'u8[512]{0}', space=vmem, size = 0x400, scoped, tag = 'output window, operand 0, single buffered']
    #allocation4 [shape = 's32[1]{0}', space=sflag, size = 0x4, scoped, tag = 'scoped memory for tpu_custom_call.1']
    %7 = vsyncpa [#allocation4], 0
    // Predicated region
    $region2: #{tpu_custom_call.1} parent=1 // pred_check
      _
    $region3: #{tpu_custom_call.1} parent=1 // pred_check_branch
      %9 = sbr.rel (0) target = $region5
    $region4: #{tpu_custom_call.1} parent=1 // pred_region
      %s10 = sadd.s32 0, 0
      %p11 = scmp.lt.s32.totalorder %s10, 0
      %s12 = scalar_select %p11, %s10, 0
      %s13 = smul.addr %s12, 4
      %s14 = smul.addr %s13, 8
      %s15 = scalar_lea.vmem %s0, %s14
      %s16 = sadd.s32 0, 0
    $region5: #{tpu_custom_call.1} parent=1 // pred_fallthru
      _
    // Predicated region
    $region6: #{tpu_custom_call.1} parent=1 // pred_check
      _
    $region7: #{tpu_custom_call.1} parent=1 // pred_check_branch
      %18 = sbr.rel (0) target = $region9
    $region8: #{tpu_custom_call.1} parent=1 // pred_region
      %s19 = sadd.s32 0, 0
      %p20 = scmp.lt.s32.totalorder %s19, 0
      %s21 = scalar_select %p20, %s19, 0
      %s22 = smul.addr %s21, 6
      %s23 = smul.addr %s22, 8
      %s24 = scalar_lea.vmem %s1, %s23
      %s25 = sadd.s32 0, 0
    $region9: #{tpu_custom_call.1} parent=1 // pred_fallthru
      _
    %s26 = sadd.s32 0, 0
    %p27 = scmp.lt.s32.totalorder %s26, 0
    %s28 = scalar_select %p27, %s26, 0
    %s29 = smul.addr %s28, 4
    %s30 = smul.addr %s29, 8
    %s31 = scalar_lea.vmem %s0, %s30
    %s32 = sadd.s32 0, 0
    %p33 = scmp.lt.s32.totalorder %s32, 0
    %s34 = scalar_select %p33, %s32, 0
    %s35 = smul.addr %s34, 6
    %s36 = smul.addr %s35, 8
    %s37 = scalar_lea.vmem %s1, %s36
    %s38 = sadd.s32 0, 0
    %p39 = scmp.lt.s32.totalorder %s38, 0
    %s40 = scalar_select %p39, %s38, 0
    %s41 = smul.addr %s40, 4
    %s42 = smul.addr %s41, 8
    %s43 = scalar_lea.vmem %s0, %s42
    %s44 = sadd.s32 0, 0
    %s45 = sadd.s32 0, 0
    %p46 = scmp.lt.s32.totalorder %s45, 0
    %s47 = scalar_select %p46, %s45, 0
    %s48 = smul.addr %s47, 6
    %s49 = smul.addr %s48, 8
    %s50 = scalar_lea.vmem %s1, %s49
    %s51 = sadd.s32 0, 0
    %p52 = scmp.eq.s32.totalorder 0, 0
    // Predicated region
    $region10: #{tpu_custom_call.1} parent=1 // pred_check
      %p53 = pneg %p52
    $region11: #{tpu_custom_call.1} parent=1 // pred_check_branch
      %55 = sbr.rel (%p53) target = $region13
    $region12: #{tpu_custom_call.1} parent=1 // pred_region
      %56 = vst [vmem:[#allocation2] sm:$0xff] 0.0
      %57 = vst [vmem:[#allocation2 + $0x8] sm:$0xff] 0.0
    $region13: #{tpu_custom_call.1} parent=1 // pred_fallthru
      _
    %v58 = vld [vmem:[%s43] sm:$0xff]
    %v59 = vld [vmem:[%s43 + $0x8] sm:$0xff]
    %v60 = vld [vmem:[%s43 + $0x10] sm:$0x1]
    %v61 = vld [vmem:[%s43 + $0x18] sm:$0x1]
    %v62 = vld [vmem:[%s50] sm:$0xff]
    %v63 = vld [vmem:[%s50 + $0x8] sm:$0xff]
    %v64 = vld [vmem:[%s50 + $0x10] sm:$0xff]
    %v65 = vld [vmem:[%s50 + $0x18] sm:$0xff]
    %v66 = vperm.slane %v58, 0
    %v67 = vmul.f32 %v62, %v66
    %v68 = vmul.f32 %v64, %v66
    %v69 = vperm.slane %v58, 1
    %v70 = vperm.slane %v59, 1
    %v71 = vmul.f32 %v62, %v69
    %v72 = vmul.f32 %v63, %v70
    %v73 = vmul.f32 %v64, %v69
    %v74 = vmul.f32 %v65, %v70
    %v75 = vperm.slane %v58, 2
    %v76 = vperm.slane %v59, 2
    %v77 = vmul.f32 %v62, %v75
    %v78 = vmul.f32 %v63, %v76
    %v79 = vmul.f32 %v64, %v75
    %v80 = vmul.f32 %v65, %v76
    %v81 = vld [vmem:[%s50] sm:$0xfe]
    %v82 = vld [vmem:[%s50 + $0x8] sm:$0xfe]
    %v83 = vld [vmem:[%s50 + $0x20] sm:$0x1]
    %v84 = vld [vmem:[%s50 + $0x28] sm:$0x1]
    %v85 = vperm.slane %v58, 3
    %v86 = vmul.f32 %v81, %v85
    %v87 = vmul.f32 %v64, %v85
    %v88 = vmul.f32 %v83, %v85
    %vm92 = vcmask 1046528
    %v93 = vrot.slane %v86, 1
    %v94 = vrot.slane %v87, 1
    %v95 = vsel %vm92, %v93, %v94
    %v96 = vrot.slane %v88, 1
    %v97 = vsel %vm92, %v94, %v96
    %v100 = vadd.f32 %v67, %v95
    %v101 = vadd.f32 %v68, %v97
    %v102 = vperm.slane %v58, 4
    %v103 = vperm.slane %v59, 4
    %v104 = vmul.f32 %v81, %v102
    %v105 = vmul.f32 %v82, %v103
    %v106 = vmul.f32 %v64, %v102
    %v107 = vmul.f32 %v65, %v103
    %v108 = vmul.f32 %v83, %v102
    %v109 = vmul.f32 %v84, %v103
    %v116 = vrot.slane %v104, 1
    %v117 = vrot.slane %v106, 1
    %v118 = vsel %vm92, %v116, %v117
    %v119 = vrot.slane %v105, 1
    %v120 = vrot.slane %v107, 1
    %v121 = vsel %vm92, %v119, %v120
    %v122 = vrot.slane %v108, 1
    %v123 = vsel %vm92, %v117, %v122
    %v124 = vrot.slane %v109, 1
    %v125 = vsel %vm92, %v120, %v124
    %v130 = vadd.f32 %v71, %v118
    %v131 = vadd.f32 %v72, %v121
    %v132 = vadd.f32 %v73, %v123
    %v133 = vadd.f32 %v74, %v125
    %v134 = vperm.slane %v58, 5
    %v135 = vperm.slane %v59, 5
    %v136 = vmul.f32 %v81, %v134
    %v137 = vmul.f32 %v82, %v135
    %v138 = vmul.f32 %v64, %v134
    %v139 = vmul.f32 %v65, %v135
    %v140 = vmul.f32 %v83, %v134
    %v141 = vmul.f32 %v84, %v135
    %v148 = vrot.slane %v136, 1
    %v149 = vrot.slane %v138, 1
    %v150 = vsel %vm92, %v148, %v149
    %v151 = vrot.slane %v137, 1
    %v152 = vrot.slane %v139, 1
    %v153 = vsel %vm92, %v151, %v152
    %v154 = vrot.slane %v140, 1
    %v155 = vsel %vm92, %v149, %v154
    %v156 = vrot.slane %v141, 1
    %v157 = vsel %vm92, %v152, %v156
    %v162 = vadd.f32 %v77, %v150
    %v163 = vadd.f32 %v78, %v153
    %v164 = vadd.f32 %v79, %v155
    %v165 = vadd.f32 %v80, %v157
    %v166 = vld [vmem:[%s50] sm:$0xfc]
    %v167 = vld [vmem:[%s50 + $0x8] sm:$0xfc]
    %v168 = vld [vmem:[%s50 + $0x20] sm:$0x3]
    %v169 = vld [vmem:[%s50 + $0x28] sm:$0x3]
    %v170 = vperm.slane %v58, 6
    %v171 = vmul.f32 %v166, %v170
    %v172 = vmul.f32 %v64, %v170
    %v173 = vmul.f32 %v168, %v170
    %vm177 = vcmask 1045504
    %v178 = vrot.slane %v171, 2
    %v179 = vrot.slane %v172, 2
    %v180 = vsel %vm177, %v178, %v179
    %v181 = vrot.slane %v173, 2
    %v182 = vsel %vm177, %v179, %v181
    %v185 = vadd.f32 %v100, %v180
    %v186 = vadd.f32 %v101, %v182
    %v187 = vperm.slane %v58, 7
    %v188 = vperm.slane %v59, 7
    %v189 = vmul.f32 %v166, %v187
    %v190 = vmul.f32 %v167, %v188
    %v191 = vmul.f32 %v64, %v187
    %v192 = vmul.f32 %v65, %v188
    %v193 = vmul.f32 %v168, %v187
    %v194 = vmul.f32 %v169, %v188
    %v201 = vrot.slane %v189, 2
    %v202 = vrot.slane %v191, 2
    %v203 = vsel %vm177, %v201, %v202
    %v204 = vrot.slane %v190, 2
    %v205 = vrot.slane %v192, 2
    %v206 = vsel %vm177, %v204, %v205
    %v207 = vrot.slane %v193, 2
    %v208 = vsel %vm177, %v202, %v207
    %v209 = vrot.slane %v194, 2
    %v210 = vsel %vm177, %v205, %v209
    %v215 = vadd.f32 %v130, %v203
    %v216 = vadd.f32 %v131, %v206
    %v217 = vadd.f32 %v132, %v208
    %v218 = vadd.f32 %v133, %v210
    %v219 = vperm.slane %v60, 0
    %v220 = vperm.slane %v61, 0
    %v221 = vmul.f32 %v166, %v219
    %v222 = vmul.f32 %v167, %v220
    %v223 = vmul.f32 %v64, %v219
    %v224 = vmul.f32 %v65, %v220
    %v225 = vmul.f32 %v168, %v219
    %v226 = vmul.f32 %v169, %v220
    %v233 = vrot.slane %v221, 2
    %v234 = vrot.slane %v223, 2
    %v235 = vsel %vm177, %v233, %v234
    %v236 = vrot.slane %v222, 2
    %v237 = vrot.slane %v224, 2
    %v238 = vsel %vm177, %v236, %v237
    %v239 = vrot.slane %v225, 2
    %v240 = vsel %vm177, %v234, %v239
    %v241 = vrot.slane %v226, 2
    %v242 = vsel %vm177, %v237, %v241
    %v247 = vadd.f32 %v162, %v235
    %v248 = vadd.f32 %v163, %v238
    %v249 = vadd.f32 %v164, %v240
    %v250 = vadd.f32 %v165, %v242
    %255 = vrot.lane.b32.xlu0 %v215, 127
    %v256 = vpop.permute.xlu0 %255
    %257 = vrot.lane.b32.xlu0 %v216, 127
    %v258 = vpop.permute.xlu0 %257
    %259 = vrot.lane.b32.xlu0 %v217, 127
    %v260 = vpop.permute.xlu0 %259
    %261 = vrot.lane.b32.xlu0 %v218, 127
    %v262 = vpop.permute.xlu0 %261
    %vm263 = vcmask 1039360
    %v264 = vsel %vm263, %v256, %v258
    %v265 = vsel %vm263, %v260, %v262
    %v268 = vadd.f32 %v185, %v264
    %v269 = vadd.f32 %v186, %v265
    %274 = vrot.lane.b32.xlu0 %v247, 126
    %v275 = vpop.permute.xlu0 %274
    %276 = vrot.lane.b32.xlu0 %v248, 126
    %v277 = vpop.permute.xlu0 %276
    %278 = vrot.lane.b32.xlu0 %v249, 126
    %v279 = vpop.permute.xlu0 %278
    %280 = vrot.lane.b32.xlu0 %v250, 126
    %v281 = vpop.permute.xlu0 %280
    %vm282 = vcmask 1031168
    %v283 = vsel %vm282, %v275, %v277
    %v284 = vsel %vm282, %v279, %v281
    %v287 = vadd.f32 %v268, %v283
    %v288 = vadd.f32 %v269, %v284
    %v289 = vand.u32 2147483647, %v287
    %v290 = vand.u32 2147483647, %v288
    %vm291 = vcmp.lt.f32.partialorder %v289, 1.0
    %vm292 = vcmp.lt.f32.partialorder %v290, 1.0
    %v293 = vmul.f32 %v287, 0.5
    %v294 = vmul.f32 %v288, 0.5
    %v295 = vmul.f32 %v293, %v287
    %v296 = vmul.f32 %v294, %v288
    %v297 = vsub.f32 %v289, 0.5
    %v298 = vsub.f32 %v290, 0.5
    %v299 = vsel %vm291, %v295, %v297
    %v300 = vsel %vm292, %v296, %v298
    %v301 = vld [vmem:[#allocation2] sm:$0xff]
    %v302 = vld [vmem:[#allocation2 + $0x8] sm:$0xff]
    %v303 = vadd.f32 %v301, %v299
    %v304 = vadd.f32 %v302, %v300
    %305 = vst [vmem:[#allocation2] sm:$0xff] %v303
    %306 = vst [vmem:[#allocation2 + $0x8] sm:$0xff] %v304
    // Predicated region
    $region14: #{tpu_custom_call.1} parent=1 // pred_check
      %p307 = pneg %p52
    $region15: #{tpu_custom_call.1} parent=1 // pred_check_branch
      %309 = sbr.rel (%p307) target = $region17
    $region16: #{tpu_custom_call.1} parent=1 // pred_region
      %v310 = vld [vmem:[#allocation2] sm:$0xff]
      %v311 = vld [vmem:[#allocation2 + $0x8] sm:$0xff]
      %v312 = vadd.f32 %v310, %v311
      %313 = vadd.xlane.f32.xlu0 %v312
      %v314 = vpop.xlane.xlu0 %313
      %v315 = vrot.slane %v314, 4
      %v316 = vadd.f32 %v314, %v315
      %v317 = vrot.slane %v316, 2
      %v318 = vadd.f32 %v316, %v317
      %v319 = vrot.slane %v318, 1
      %v320 = vadd.f32 %v318, %v319
      %s321 = vtos %v320
      %v322 = vstv %s321
      %v323 = vmul.f32 %v322, 0.00048828125
      %vm324 = vcmask 0
      %325 = vst.msk [vmem:[#allocation3] sm:$0x1] %vm324, %v323
    $region17: #{tpu_custom_call.1} parent=1 // pred_fallthru
      _
    // Predicated region
    $region18: #{tpu_custom_call.1} parent=1 // pred_check
      _
    $region19: #{tpu_custom_call.1} parent=1 // pred_check_branch
      %327 = sbr.rel (0) target = $region21
    $region20: #{tpu_custom_call.1} parent=1 // pred_region
      %329 = vsyncadd [#allocation4], 0
      %s331 = sshll.u32 [#allocation3], 4
      %s332 = int_to_ptr.vmem [resolvable:$true] %s331
      %s333 = sshll.u32 %s2, 4
      %s334 = int_to_ptr.hbm [resolvable:$true] %s333
      %336 = dma.vmem_to_hbm [thread:$0]  %s332, 16, %s334, [#allocation4]
    $region21: #{tpu_custom_call.1} parent=1 // pred_fallthru
      _
    // Predicated region
    $region22: #{tpu_custom_call.1} parent=1 // pred_check
      _
    $region23: #{tpu_custom_call.1} parent=1 // pred_check_branch
      %338 = sbr.rel (0) target = $region25
    $region24: #{tpu_custom_call.1} parent=1 // pred_region
      %340 = dma.done [#allocation4], 16
    $region25: #{tpu_custom_call.1} parent=1 // pred_fallthru
      _
    %341 = vsyncpa [#allocation4], 1

</llo_original>
